<compile_context>
chip_gen: v7x
topology: tpu7x:2x2x1
jax: 0.10.0
libtpu: 0.0.40
codegen_flags: <defaults>
</compile_context>

<pallas_src>
import functools

import jax
import jax.numpy as jnp
from jax.experimental import pallas as pl
from jax.experimental.pallas import tpu as pltpu

_BOUND = 1.0   # float-image bound (torchvision float path)


# ---------------------------------------------------------------------------
# Hardware-aware sizing
# ---------------------------------------------------------------------------
def _hw_params():
    """Returns (target_block_bytes, vmem_budget_bytes) for this chip."""
    vmem_phys = 64 << 20                       # conservative default (v7x VMEM/TC)
    try:
        info = pltpu.get_tpu_info()
        v = int(getattr(info, "vmem_capacity_bytes", 0) or 0)
        if v > 0:
            vmem_phys = v
    except Exception:                          # best-effort query
        pass
    vmem_budget = (vmem_phys * 3) // 4         # ~75% of physical VMEM
    # Bigger streamed blocks where VMEM allows: ~8 MiB on v5e/v6e (128 MiB VMEM),
    # ~4 MiB on v7x (64 MiB).  Amortizes the ~0.35 us/grid-step overhead.
    target_block_bytes = (8 << 20) if vmem_phys >= (96 << 20) else (4 << 20)
    return target_block_bytes, vmem_budget


def _resident_bytes_per_elem(itemsize):
    # 2x input + 2x output double buffers (native dtype) + f32 kernel temps.
    return 4 * itemsize + 8


def _vmem_limit(block_elems, itemsize, vmem_budget):
    need = block_elems * _resident_bytes_per_elem(itemsize) + (2 << 20)
    return int(min(max(need, 32 << 20), vmem_budget))


# ---------------------------------------------------------------------------
# Fused single-pass kernel: each block holds one or more WHOLE planes laid out
# as (block_rows, H*W).  Lane-dense DMAs; per-plane min/max is a lane-axis
# reduce.  NOTE: the reduction is strictly per-row, which is what makes the
# OOB-padded rows of the last partial block safe (they are dropped on
# writeback and never mix with valid rows).
# ---------------------------------------------------------------------------
def _autocontrast_fused_kernel(x_ref, o_ref):
    x = x_ref[...]
    # min/max are exact in the native dtype (incl. bf16/fp16); only the
    # (block_rows, 1) results and the affine math are promoted to f32.
    mn = jnp.min(x, axis=-1, keepdims=True).astype(jnp.float32)
    mx = jnp.max(x, axis=-1, keepdims=True).astype(jnp.float32)
    eq = mx == mn
    # Fold the constant-plane pass-through into per-plane scalars so the
    # per-element work is just: cast, sub, mul, clip, cast.
    scale = jnp.where(eq, 1.0, _BOUND / jnp.where(eq, 1.0, mx - mn))
    offset = jnp.where(eq, 0.0, mn)
    lo = jnp.where(eq, -jnp.inf, 0.0)
    hi = jnp.where(eq, jnp.inf, _BOUND)
    y = (x.astype(jnp.float32) - offset) * scale
    o_ref[...] = jnp.clip(y, lo, hi).astype(o_ref.dtype)


def _autocontrast_fused(x2d, block_rows, vmem_bytes):
    rows, length = x2d.shape
    return pl.pallas_call(
        _autocontrast_fused_kernel,
        out_shape=jax.ShapeDtypeStruct((rows, length), x2d.dtype),
        grid_spec=pltpu.PrefetchScalarGridSpec(
            num_scalar_prefetch=0,
            grid=(pl.cdiv(rows, block_rows),),
            in_specs=[pl.BlockSpec((block_rows, length), lambda i: (i, 0))],
            out_specs=pl.BlockSpec((block_rows, length), lambda i: (i, 0)),
        ),
        compiler_params=pltpu.CompilerParams(
            dimension_semantics=("parallel",),
            vmem_limit_bytes=vmem_bytes,
        ),
    )(x2d)


# ---------------------------------------------------------------------------
# Two-pass path for planes too large to hold resident in VMEM.
# Pass 1: per-plane min/max, chunked along the flattened plane (lane) axis,
#         with an extra 'parallel' segment axis (uses both v7x TensorCores).
# Pass 2: elementwise rescale; affine params derived in-kernel from mn/mx.
# ---------------------------------------------------------------------------
def _minmax_kernel(x_ref, mn_ref, mx_ref, *, length, chunk, seg_chunks):
    s = pl.program_id(1)
    k = pl.program_id(2)
    x = x_ref[...]

    def unmasked(xv):
        return (jnp.min(xv, axis=-1, keepdims=True).astype(jnp.float32),
                jnp.max(xv, axis=-1, keepdims=True).astype(jnp.float32))

    if (length % chunk) != 0:
        # Only the globally LAST chunk carries a ragged tail; gate the masking
        # so every other chunk pays zero extra VALU work.
        def masked(xv):
            xf = xv.astype(jnp.float32)
            base = (s * seg_chunks + k) * chunk
            pos = base + jax.lax.broadcasted_iota(jnp.int32, xf.shape, 1)
            valid = pos < length
            return (jnp.min(jnp.where(valid, xf, jnp.inf), axis=-1, keepdims=True),
                    jnp.max(jnp.where(valid, xf, -jnp.inf), axis=-1, keepdims=True))

        is_last = jnp.logical_and(s == pl.num_programs(1) - 1,
                                  k == pl.num_programs(2) - 1)
        cmn, cmx = jax.lax.cond(is_last, masked, unmasked, x)
    else:
        cmn, cmx = unmasked(x)

    @pl.when(k == 0)
    def _():
        mn_ref[0] = cmn
        mx_ref[0] = cmx

    @pl.when(k > 0)
    def _():
        mn_ref[0] = jnp.minimum(mn_ref[0], cmn)
        mx_ref[0] = jnp.maximum(mx_ref[0], cmx)


def _rescale_kernel(mn_ref, mx_ref, x_ref, o_ref):
    mn = mn_ref[...]              # (block_rows, 1) f32
    mx = mx_ref[...]
    eq = mx == mn
    scale = jnp.where(eq, 1.0, _BOUND / jnp.where(eq, 1.0, mx - mn))
    offset = jnp.where(eq, 0.0, mn)
    lo = jnp.where(eq, -jnp.inf, 0.0)
    hi = jnp.where(eq, jnp.inf, _BOUND)
    y = (x_ref[...].astype(jnp.float32) - offset) * scale
    o_ref[...] = jnp.clip(y, lo, hi).astype(o_ref.dtype)


def _autocontrast_two_pass(x2d, block_rows, chunk, vmem_bytes, num_seg=2):
    rows, length = x2d.shape
    n_chunks = (length + chunk - 1) // chunk
    # Second 'parallel' grid axis (segments) only when it divides evenly and
    # there are at least 2 chunks per segment; harmless on 1-TC chips.
    seg = num_seg if (num_seg > 1 and n_chunks % num_seg == 0
                      and n_chunks >= 2 * num_seg) else 1
    seg_chunks = n_chunks // seg

    mn_seg, mx_seg = pl.pallas_call(
        functools.partial(_minmax_kernel, length=length, chunk=chunk,
                          seg_chunks=seg_chunks),
        out_shape=(jax.ShapeDtypeStruct((seg, rows, 1), jnp.float32),
                   jax.ShapeDtypeStruct((seg, rows, 1), jnp.float32)),
        grid_spec=pltpu.PrefetchScalarGridSpec(
            num_scalar_prefetch=0,
            grid=(pl.cdiv(rows, block_rows), seg, seg_chunks),
            in_specs=[pl.BlockSpec((block_rows, chunk),
                                   lambda i, s, k: (i, s * seg_chunks + k))],
            out_specs=(pl.BlockSpec((1, block_rows, 1), lambda i, s, k: (s, i, 0)),
                       pl.BlockSpec((1, block_rows, 1), lambda i, s, k: (s, i, 0))),
        ),
        compiler_params=pltpu.CompilerParams(
            dimension_semantics=("parallel", "parallel", "arbitrary"),
            vmem_limit_bytes=vmem_bytes,
        ),
    )(x2d)

    # Tiny per-segment partials combined in plain JAX between passes.
    mn = jnp.min(mn_seg, axis=0)   # (rows, 1) f32
    mx = jnp.max(mx_seg, axis=0)

    return pl.pallas_call(
        _rescale_kernel,
        out_shape=jax.ShapeDtypeStruct((rows, length), x2d.dtype),
        grid_spec=pltpu.PrefetchScalarGridSpec(
            num_scalar_prefetch=0,
            grid=(pl.cdiv(rows, block_rows), n_chunks),
            in_specs=[pl.BlockSpec((block_rows, 1), lambda i, j: (i, 0)),
                      pl.BlockSpec((block_rows, 1), lambda i, j: (i, 0)),
                      pl.BlockSpec((block_rows, chunk), lambda i, j: (i, j))],
            out_specs=pl.BlockSpec((block_rows, chunk), lambda i, j: (i, j)),
        ),
        compiler_params=pltpu.CompilerParams(
            dimension_semantics=("parallel", "parallel"),
            vmem_limit_bytes=vmem_bytes,
        ),
    )(mn, mx, x2d)


# ---------------------------------------------------------------------------
# Public wrapper / dispatcher
# ---------------------------------------------------------------------------
def autocontrast(image: jax.Array, p: float = 1.0) -> jax.Array:
    """Pallas TPU autocontrast.  image: (N, C, H, W) float image in [0, 1]."""
    # TODO(synk): stochastic application (torch.rand(1) < p) is host-side RNG
    # control flow; with the module default p=1.0 the transform is always applied.
    assert image.ndim == 4, "expected NCHW input"
    assert jnp.issubdtype(image.dtype, jnp.floating), "float image expected"
    # TODO(synk): integer (uint8) path with bound=255 and rounding not implemented.

    n, c, h, w = image.shape
    rows, length = n * c, h * w
    itemsize = jnp.dtype(image.dtype).itemsize
    sub = {4: 8, 2: 16, 1: 32}.get(itemsize, 8)     # native sublane multiple

    target_bytes, vmem_budget = _hw_params()
    per_plane_resident = length * _resident_bytes_per_elem(itemsize)
    max_rows_vmem = max(0, (vmem_budget - (4 << 20)) // max(1, per_plane_resident))
    min_rows = rows if rows < sub else sub          # smallest useful block

    x2d = image.reshape(rows, length)

    if max_rows_vmem >= min_rows:
        # Fused single pass: several whole planes per block, sublane-dense.
        if rows < sub:
            block_rows = rows
        else:
            rows_pad = ((rows + sub - 1) // sub) * sub
            block_rows = max(1, target_bytes // max(1, length * itemsize))
            block_rows = max(sub, (block_rows // sub) * sub)
            block_rows = min(block_rows, max(sub, (max_rows_vmem // sub) * sub))
            block_rows = min(block_rows, rows_pad)
            if rows >= 4 * sub:                     # keep >= 4 pipelined steps
                block_rows = min(block_rows, max(sub, (rows // 4 // sub) * sub))
        vmem = _vmem_limit(block_rows * length, itemsize, vmem_budget)
        out = _autocontrast_fused(x2d, block_rows, vmem)
        return out.reshape(image.shape)

    # Huge planes: chunked two-pass (1.5x HBM traffic but never VMEM-OOMs).
    block_rows = rows if rows < sub else sub
    elem_budget = max(128, (vmem_budget - (4 << 20))
                      // max(1, block_rows * _resident_bytes_per_elem(itemsize)))
    chunk = min(target_bytes // max(1, block_rows * itemsize), elem_budget)
    chunk = max(128, (chunk // 128) * 128)
    chunk = min(chunk, ((length + 127) // 128) * 128)
    vmem = _vmem_limit(block_rows * chunk, itemsize, vmem_budget)
    out = _autocontrast_two_pass(x2d, block_rows, chunk, vmem, num_seg=2)
    return out.reshape(image.shape)


# ---------------------------------------------------------------------------
# Pure-JAX reference mirroring torchvision autocontrast (float path)
# ---------------------------------------------------------------------------
def _reference(image: jnp.ndarray) -> jnp.ndarray:
    x = image.astype(jnp.float32)
    mn = x.min(axis=(-2, -1), keepdims=True)
    mx = x.max(axis=(-2, -1), keepdims=True)
    eq = mx == mn
    scale = jnp.where(eq, 1.0, _BOUND / jnp.where(eq, 1.0, mx - mn))
    y = jnp.clip((x - jnp.where(eq, 0.0, mn)) * scale, 0.0, _BOUND)
    return jnp.where(eq, x, y)


if __name__ == "__main__":
    key = jax.random.PRNGKey(0)
    k1, k2 = jax.random.split(key)

    n, c, h, w = 2, 4, 16, 16
    # Image in [0.2, 0.8] so autocontrast actually stretches the range.
    x = 0.2 + 0.6 * jax.random.uniform(k1, (n, c, h, w), dtype=jnp.float32)
    x = x.at[0, 1].set(0.5)     # constant plane (mn == mx -> unchanged)
    x = x.at[1, 2].set(1.3)     # constant plane outside [0, 1] (pass-through)
    ref = _reference(x)

    # Main dispatcher (fused, lane- and sublane-dense path).
    y = autocontrast(x, p=1.0)
    jax.block_until_ready(y)
    assert y.shape == x.shape and y.dtype == x.dtype
    assert jnp.allclose(y, ref, atol=1e-5, rtol=1e-5), "fused path mismatch"

    # Odd spatial size (400 px/plane): fused path + two-pass path with
    # 4 chunks -> 2 parallel segments and a lax.cond-gated ragged tail.
    h2 = w2 = 20
    xo = 0.1 + 0.7 * jax.random.uniform(k2, (n, c, h2, w2), dtype=jnp.float32)
    refo = _reference(xo)
    yo = autocontrast(xo)
    assert jnp.allclose(yo, refo, atol=1e-5, rtol=1e-5), "fused odd-size mismatch"
    yo_tp = _autocontrast_two_pass(
        xo.reshape(n * c, h2 * w2), block_rows=8, chunk=128,
        vmem_bytes=32 << 20, num_seg=2).reshape(xo.shape)
    assert jnp.allclose(yo_tp, refo, atol=1e-5, rtol=1e-5), "two-pass odd-size mismatch"

    # Two-pass with an even chunk count but too few chunks for 2 segments
    # (seg=1 fallback, no tail masking).
    y_tp = _autocontrast_two_pass(
        x.reshape(n * c, h * w), block_rows=8, chunk=128,
        vmem_bytes=32 << 20, num_seg=2).reshape(x.shape)
    assert jnp.allclose(y_tp, ref, atol=1e-5, rtol=1e-5), "two-pass mismatch"

    # Native-dtype streaming: bf16 in -> bf16 out, min/max reduce in bf16,
    # affine math in f32 inside the kernel.
    xb = x.astype(jnp.bfloat16)
    yb = autocontrast(xb)
    assert yb.dtype == jnp.bfloat16
    assert jnp.allclose(yb.astype(jnp.float32), _reference(xb),
                        atol=1e-2, rtol=1e-2), "bf16 path mismatch"

    print("KERNEL_OK")
</pallas_src>

<mosaic_0001>
module attributes {stable_mosaic.version = 11 : i64} {
  func.func @_autocontrast_fused_kernel(%arg0: i32, %arg1: memref<8x256xf32, #tpu.memory_space<vmem>>, %arg2: memref<8x256xf32, #tpu.memory_space<vmem>>) attributes {dimension_semantics = [#tpu.dimension_semantics<parallel>], iteration_bounds = array<i64: 1>, scalar_prefetch = 0 : i64, scratch_operands = 0 : i64, tpu.core_type = #tpu.core_type<tc>, window_params = [{transform_indices = @transform_0, window_bounds = array<i64: 8, 256>}, {transform_indices = @transform_1, window_bounds = array<i64: 8, 256>}]} {
    %c0 = arith.constant 0 : index
    %c0_0 = arith.constant 0 : index
    %0 = vector.load %arg1[%c0, %c0_0] : memref<8x256xf32, #tpu.memory_space<vmem>>, vector<8x256xf32>
    %cst = arith.constant dense<0x7F800000> : vector<8xf32>
    %1 = vector.multi_reduction <minimumf>, %0, %cst [1] : vector<8x256xf32> to vector<8xf32>
    %2 = vector.shape_cast %1 : vector<8xf32> to vector<8x1xf32>
    %cst_1 = arith.constant dense<0xFF800000> : vector<8xf32>
    %3 = vector.multi_reduction <maximumf>, %0, %cst_1 [1] : vector<8x256xf32> to vector<8xf32>
    %4 = vector.shape_cast %3 : vector<8xf32> to vector<8x1xf32>
    %5 = arith.cmpf oeq, %4, %2 : vector<8x1xf32>
    %6 = arith.subf %4, %2 : vector<8x1xf32>
    %cst_2 = arith.constant 1.000000e+00 : f32
    %7 = vector.broadcast %cst_2 : f32 to vector<8x1xf32>
    %8 = arith.select %5, %7, %6 : vector<8x1xi1>, vector<8x1xf32>
    %cst_3 = arith.constant 1.000000e+00 : f32
    %9 = vector.broadcast %cst_3 : f32 to vector<8x1xf32>
    %10 = arith.divf %9, %8 : vector<8x1xf32>
    %cst_4 = arith.constant 1.000000e+00 : f32
    %11 = vector.broadcast %cst_4 : f32 to vector<8x1xf32>
    %12 = arith.select %5, %11, %10 : vector<8x1xi1>, vector<8x1xf32>
    %cst_5 = arith.constant 0.000000e+00 : f32
    %13 = vector.broadcast %cst_5 : f32 to vector<8x1xf32>
    %14 = arith.select %5, %13, %2 : vector<8x1xi1>, vector<8x1xf32>
    %cst_6 = arith.constant 0xFF800000 : f32
    %cst_7 = arith.constant 0.000000e+00 : f32
    %15 = vector.broadcast %cst_6 : f32 to vector<8x1xf32>
    %16 = vector.broadcast %cst_7 : f32 to vector<8x1xf32>
    %17 = arith.select %5, %15, %16 : vector<8x1xi1>, vector<8x1xf32>
    %cst_8 = arith.constant 0x7F800000 : f32
    %cst_9 = arith.constant 1.000000e+00 : f32
    %18 = vector.broadcast %cst_8 : f32 to vector<8x1xf32>
    %19 = vector.broadcast %cst_9 : f32 to vector<8x1xf32>
    %20 = arith.select %5, %18, %19 : vector<8x1xi1>, vector<8x1xf32>
    %21 = vector.broadcast %14 : vector<8x1xf32> to vector<8x256xf32>
    %22 = arith.subf %0, %21 : vector<8x256xf32>
    %23 = vector.broadcast %12 : vector<8x1xf32> to vector<8x256xf32>
    %24 = arith.mulf %22, %23 : vector<8x256xf32>
    %25 = vector.broadcast %17 : vector<8x1xf32> to vector<8x256xf32>
    %26 = arith.maximumf %25, %24 : vector<8x256xf32>
    %27 = vector.broadcast %20 : vector<8x1xf32> to vector<8x256xf32>
    %28 = arith.minimumf %27, %26 : vector<8x256xf32>
    %c0_10 = arith.constant 0 : index
    %c0_11 = arith.constant 0 : index
    %29 = vector.load %arg2[%c0_10, %c0_11] : memref<8x256xf32, #tpu.memory_space<vmem>>, vector<8x256xf32>
    tpu.vector_store %arg2[%c0_10, %c0_11], %28 {strides = array<i32>} : memref<8x256xf32, #tpu.memory_space<vmem>>, vector<8x256xf32>,
    return
  }
  func.func @transform_0(%arg0: i32) -> (i32, i32) {
    %c0_i32 = arith.constant 0 : i32
    %c0_i32_0 = arith.constant 0 : i32
    return %arg0, %c0_i32 : i32, i32
  }
  func.func @transform_1(%arg0: i32) -> (i32, i32) {
    %c0_i32 = arith.constant 0 : i32
    %c0_i32_0 = arith.constant 0 : i32
    return %arg0, %c0_i32 : i32, i32
  }
}

</mosaic_0001>

<llo_original>
// kernel: tpu_custom_call.1
$region0: #{tpu_custom_call.1}
  #allocation0 [shape = 'u32[]', space=smem, size = 0x4, offset = 0x4, fixed_abs, tag = 'smem constant byte address 0x4 - core index']
  #allocation1 [shape = 'u32[144,128]{1,0:T(1,128)}', space=vmem, size = 0x12000, scoped, tag = 'internal scratch']
  %s0 = inlined_call_operand.hbm [shape: f32[8,256], index: 0, kind: input, shape index: {}]
  %s1 = inlined_call_operand.hbm [shape: f32[8,256], index: 1, kind: output, shape index: {}]
  %s2 = sld [smem:[#allocation0]]
  $region18: #{tpu_custom_call.1} parent=0
    _
  %s4 = ssub.s32 1, %s2
  %s5 = scalar_select 0, %s4, %s2
  $region1: #{tpu_custom_call.1} parent=0
    #allocation2 [shape = 'u8[8192]{0}', space=vmem, size = 0x2000, scoped, tag = 'input window, operand 0, single buffered']
    #allocation3 [shape = 's32[1]{0}', space=sflag, size = 0x4, scoped, tag = 'scoped memory for tpu_custom_call.1']
    #allocation4 [shape = 's32[1]{0}', space=sflag, size = 0x4, scoped, tag = 'scoped memory for tpu_custom_call.1']
    #allocation5 [shape = 'u8[8192]{0}', space=vmem, size = 0x2000, scoped, tag = 'output window, operand 0, single buffered']
    %6 = vsyncpa [#allocation3], 0
    %7 = vsyncpa [#allocation4], 0
    // Predicated region
    $region2: #{tpu_custom_call.1} parent=1 // pred_check
      _
    $region3: #{tpu_custom_call.1} parent=1 // pred_check_branch
      %9 = sbr.rel (0) target = $region5
    $region4: #{tpu_custom_call.1} parent=1 // pred_region
      %s11 = ssub.s32 256, 256
      %12 = vsyncadd [#allocation3], %s11
      %s14 = sshll.u32 [#allocation2], 4
      %s15 = int_to_ptr.vmem [resolvable:$true] %s14
      %17 = dma.hbm_to_vmem [thread:$0]  %s0, 256, %s15, [#allocation3]
    $region5: #{tpu_custom_call.1} parent=1 // pred_fallthru
      _
    // Predicated region
    $region6: #{tpu_custom_call.1} parent=1 // pred_check
      _
    $region7: #{tpu_custom_call.1} parent=1 // pred_check_branch
      %19 = sbr.rel (0) target = $region9
    $region8: #{tpu_custom_call.1} parent=1 // pred_region
      %20 = dma.done [#allocation3], 256
    $region9: #{tpu_custom_call.1} parent=1 // pred_fallthru
      _
    %v21 = vld [vmem:[#allocation2] sm:$0xff]
    %v22 = vld [vmem:[#allocation2 + $0x8] sm:$0xff]
    %v23 = vmin.f32 %v21, %v22
    %24 = vmin.xlane.f32.xlu0 %v23
    %v25 = vpop.xlane.xlu0 %24
    %v26 = vmax.f32 %v21, %v22
    %27 = vmax.xlane.f32.xlu0 %v26
    %v28 = vpop.xlane.xlu0 %27
    %vm29 = vcmp.eq.f32.partialorder %v28, %v25
    %v30 = vsub.f32 %v28, %v25
    %v31 = vsel %vm29, 1.0, %v30
    %v32 = vrcp.pop %v31
    %v33 = vmul.f32 1.0, %v32
    %v34 = vsel %vm29, 1.0, %v33
    %v35 = vsel %vm29, 0.0, %v25
    %v36 = vsel %vm29, -inf, 0.0
    %v37 = vsel %vm29, inf, 1.0
    %v38 = vsub.f32 %v21, %v35
    %v39 = vsub.f32 %v22, %v35
    %v40 = vmul.f32 %v38, %v34
    %v41 = vmul.f32 %v39, %v34
    %v42 = vmax.f32 %v36, %v40
    %v43 = vmax.f32 %v36, %v41
    %v44 = vmin.f32 %v37, %v42
    %v45 = vmin.f32 %v37, %v43
    %46 = vst [vmem:[#allocation5] sm:$0xff] %v44
    %47 = vst [vmem:[#allocation5 + $0x8] sm:$0xff] %v45
    // Predicated region
    $region10: #{tpu_custom_call.1} parent=1 // pred_check
      _
    $region11: #{tpu_custom_call.1} parent=1 // pred_check_branch
      %49 = sbr.rel (0) target = $region13
    $region12: #{tpu_custom_call.1} parent=1 // pred_region
      %s51 = ssub.s32 256, 256
      %52 = vsyncadd [#allocation4], %s51
      %s54 = sshll.u32 [#allocation5], 4
      %s55 = int_to_ptr.vmem [resolvable:$true] %s54
      %57 = dma.vmem_to_hbm [thread:$0]  %s55, 256, %s1, [#allocation4]
    $region13: #{tpu_custom_call.1} parent=1 // pred_fallthru
      _
    // Predicated region
    $region14: #{tpu_custom_call.1} parent=1 // pred_check
      _
    $region15: #{tpu_custom_call.1} parent=1 // pred_check_branch
      %59 = sbr.rel (0) target = $region17
    $region16: #{tpu_custom_call.1} parent=1 // pred_region
      %60 = dma.done [#allocation4], 256
    $region17: #{tpu_custom_call.1} parent=1 // pred_fallthru
      _
    %61 = vsyncpa [#allocation3], 1
    %62 = vsyncpa [#allocation4], 1

</llo_original>
